<compile_context>
chip_gen: v5e
topology: v5e:2x2
jax: 0.10.0
libtpu: 0.0.40
codegen_flags: <defaults>
</compile_context>

<pallas_src>
import functools

import jax
import jax.numpy as jnp
from jax.experimental import pallas as pl
from jax.experimental.pallas import tpu as pltpu


def _round_up(x, m):
    return (x + m - 1) // m * m


def _vmem_capacity_bytes():
    """Physical per-core VMEM; fall back to the smallest generation (64 MiB)."""
    try:
        cap = int(pltpu.get_tpu_info().vmem_capacity_bytes)
        if cap > 0:
            return cap
    except Exception:
        pass
    return 64 * 1024 * 1024


def _pick_block(n_pad, limit, multiple):
    """Largest multiple of `multiple` that divides n_pad and is <= limit."""
    best = multiple
    limit = min(limit, n_pad)
    d = multiple
    while d <= limit:
        if n_pad % d == 0:
            best = d
        d += multiple
    return best


# --------------------------------------------------------------------------
# Kernel 1: h = x @ W (bf16 out) ; f1 = sum(h * a1, -1) ; f2 = sum(h * a2, -1)
# --------------------------------------------------------------------------
def _project_kernel(x_ref, w_ref, a_ref, h_ref, f1_ref, f2_ref):
    # For very wide in_features a K grid axis + f32 accumulator would bound
    # VMEM; typical GAT feature widths make the single-shot matmul fine.
    h = jnp.dot(x_ref[...], w_ref[...], preferred_element_type=jnp.float32)
    h_ref[...] = h.astype(h_ref.dtype)          # bf16 store
    a1 = a_ref[0:1, :]                          # (1, F_pad)
    a2 = a_ref[1:2, :]                          # (1, F_pad)
    # VPU multiply + lane reduce in f32 (attention logits stay full precision;
    # avoids 1-lane-wide MXU matmuls and in-kernel transposes).
    f1_ref[...] = jnp.sum(h * a1, axis=-1, keepdims=True)
    f2_ref[...] = jnp.sum(h * a2, axis=-1, keepdims=True)


# --------------------------------------------------------------------------
# Kernel 2: flash-style masked softmax + attention @ h + ELU
# --------------------------------------------------------------------------
def _attn_kernel(f1_ref, f2t_ref, adj_ref, h_ref, o_ref,
                 m_ref, l_ref, acc_ref, *, alpha, block_k, h_resident):
    j = pl.program_id(1)

    @pl.when(j == 0)
    def _():
        m_ref[...] = jnp.full(m_ref.shape, -jnp.inf, m_ref.dtype)
        l_ref[...] = jnp.zeros(l_ref.shape, l_ref.dtype)
        acc_ref[...] = jnp.zeros(acc_ref.shape, acc_ref.dtype)

    # e_ij = LeakyReLU(f1_i + f2_j), masked by adjacency (int8).
    e = f1_ref[...] + f2t_ref[...]              # (TQ,1)+(1,TK) -> (TQ,TK)
    if 0.0 < alpha < 1.0:
        e = jnp.maximum(e, alpha * e)           # cheaper than compare+select
    else:
        e = jnp.where(e > 0, e, alpha * e)
    e = jnp.where(adj_ref[...] > 0, e, -9e15)

    m_prev = m_ref[...]
    m_new = jnp.maximum(m_prev, jnp.max(e, axis=-1, keepdims=True))
    corr = jnp.exp(m_prev - m_new)
    p = jnp.exp(e - m_new)                      # f32 exp (safe on v5e too)

    if h_resident:
        # h fully VMEM-resident (constant index_map); slice the column block.
        start = pl.multiple_of(j * block_k, block_k)
        h_blk = h_ref[pl.ds(start, block_k), :]
    else:
        # Streamed per column block (large-graph / v7x fallback).
        h_blk = h_ref[...]

    l_ref[...] = corr * l_ref[...] + jnp.sum(p, axis=-1, keepdims=True)
    # bf16 p @ bf16 h on the MXU, f32 accumulation.
    acc_ref[...] = corr * acc_ref[...] + jnp.dot(
        p.astype(h_blk.dtype), h_blk, preferred_element_type=jnp.float32)
    m_ref[...] = m_new

    @pl.when(j == pl.num_programs(1) - 1)
    def _():
        # Exact reciprocal kept for parity with the reference normalization.
        h_prime = acc_ref[...] * pl.reciprocal(l_ref[...], approx=False)
        # ELU (concat=True); expm1 for accuracy on the negative branch.
        o_ref[...] = jnp.where(h_prime > 0, h_prime,
                               jnp.expm1(h_prime)).astype(o_ref.dtype)


# --------------------------------------------------------------------------
# Wrapper
# --------------------------------------------------------------------------
def graph_attention_layer(x, W, a, adj, *, alpha=0.2,
                          block_q=None, block_k=None):
    """x: (N, in_f), W: (in_f, out_f), a: (2*out_f, 1), adj: (N, N).

    adj may alternatively be a pre-packed padded int8 mask of shape
    (n_pad, n_pad) to skip the per-call adjacency preprocessing.
    """
    N, in_f = x.shape
    out_f = W.shape[1]

    vmem_cap = _vmem_capacity_bytes()

    # Default tile sizes: larger blocks amortize the per-step (block_q, f_pad)
    # accumulator rescale and the ~0.35 us/step grid overhead; keep block_q
    # moderate when VMEM is small (v7x has 64 MiB per core).
    if block_k is None:
        block_k = 512
    if block_q is None:
        block_q = 512 if vmem_cap > 96 * 1024 * 1024 else 256

    f_pad = _round_up(out_f, 128)               # lane-dense output slab
    n_pad = _round_up(N, 128)                   # minimal padding for small N
    block_k = _pick_block(n_pad, block_k, 128)  # lane axis of adj tiles
    block_q = _pick_block(n_pad, block_q, 16)   # sublane axis (bf16-safe)

    f32 = jnp.float32
    xp = jnp.zeros((n_pad, in_f), f32).at[:N].set(x.astype(f32))
    Wp = jnp.zeros((in_f, f_pad), f32).at[:, :out_f].set(W.astype(f32))
    a_rows = jnp.zeros((2, f_pad), f32).at[:, :out_f].set(
        a.astype(f32).reshape(2, out_f))

    # Adjacency as int8 mask (4x less HBM traffic than f32).  Callers that
    # reuse the same graph should pre-pack + pad once and pass the int8 mask
    # directly so this XLA prologue does not run every call.
    if adj.dtype == jnp.int8 and adj.shape == (n_pad, n_pad):
        adj_i8 = adj
    else:
        mask = adj if adj.dtype == jnp.bool_ else (adj > 0)
        adj_i8 = jnp.zeros((n_pad, n_pad), jnp.int8).at[:N, :N].set(
            mask.astype(jnp.int8))

    # ---- VMEM budgeting (per generation; never request full physical) -----
    h_bytes = n_pad * f_pad * 2                 # bf16 h slab
    # Keep h fully VMEM-resident (one HBM read) while it fits comfortably;
    # otherwise stream (block_k, f_pad) tiles per column step.  Budget 2x in
    # case the constant-index block is still double-buffered by the pipeline.
    h_resident = 2 * h_bytes <= int(0.4 * vmem_cap)

    lane, sub = 128, 8
    in_f_lane = _round_up(in_f, lane)
    need1 = (2 * block_q * in_f_lane * 4            # x tiles (double-buffered)
             + 2 * _round_up(in_f, sub) * f_pad * 4  # W (resident, 2x safety)
             + 2 * sub * f_pad * 4                   # a rows
             + 2 * block_q * f_pad * 2               # h out tiles (bf16)
             + 4 * block_q * lane * 4)               # f1/f2 out tiles
    need2 = ((2 * h_bytes if h_resident else 2 * block_k * f_pad * 2)
             + 2 * block_q * block_k                 # adj int8 tiles
             + 2 * block_q * lane * 4                # f1 tiles (lane-padded)
             + 2 * sub * block_k * 4                 # f2^T tiles
             + 2 * block_q * f_pad * 4               # out tiles
             + 2 * block_q * lane * 4                # m, l scratch
             + block_q * f_pad * 4)                  # acc scratch

    def _limit(need):
        return min(max(int(1.3 * need) + (2 << 20), 16 << 20),
                   int(0.875 * vmem_cap))

    vmem1, vmem2 = _limit(need1), _limit(need2)

    # ---------------- pass 1: projections (h bf16, f1, f2) -----------------
    h, f1, f2 = pl.pallas_call(
        _project_kernel,
        out_shape=(
            jax.ShapeDtypeStruct((n_pad, f_pad), jnp.bfloat16),
            jax.ShapeDtypeStruct((n_pad, 1), jnp.float32),
            jax.ShapeDtypeStruct((n_pad, 1), jnp.float32),
        ),
        grid_spec=pltpu.PrefetchScalarGridSpec(
            num_scalar_prefetch=0,
            grid=(n_pad // block_q,),
            in_specs=[
                pl.BlockSpec((block_q, in_f), lambda i: (i, 0)),
                pl.BlockSpec((in_f, f_pad), lambda i: (0, 0)),
                pl.BlockSpec((2, f_pad), lambda i: (0, 0)),
            ],
            out_specs=(
                pl.BlockSpec((block_q, f_pad), lambda i: (i, 0)),
                pl.BlockSpec((block_q, 1), lambda i: (i, 0)),
                pl.BlockSpec((block_q, 1), lambda i: (i, 0)),
            ),
        ),
        compiler_params=pltpu.CompilerParams(
            dimension_semantics=("parallel",),
            vmem_limit_bytes=vmem1),
    )(xp, Wp, a_rows)

    # f2 relaid out once in the wrapper (tiny (N,1)->(1,N)) so the attention
    # kernel never transposes per tile.
    f2t = f2.reshape(1, n_pad)

    # ---------------- pass 2: tiled masked softmax + attention @ h ---------
    if h_resident:
        h_spec = pl.BlockSpec((n_pad, f_pad), lambda i, j: (0, 0))
    else:
        h_spec = pl.BlockSpec((block_k, f_pad), lambda i, j: (j, 0))

    kernel = functools.partial(_attn_kernel, alpha=float(alpha),
                               block_k=block_k, h_resident=h_resident)
    out = pl.pallas_call(
        kernel,
        out_shape=jax.ShapeDtypeStruct((n_pad, f_pad), jnp.float32),
        grid_spec=pltpu.PrefetchScalarGridSpec(
            num_scalar_prefetch=0,
            grid=(n_pad // block_q, n_pad // block_k),
            in_specs=[
                pl.BlockSpec((block_q, 1), lambda i, j: (i, 0)),       # f1
                pl.BlockSpec((1, block_k), lambda i, j: (0, j)),       # f2^T
                pl.BlockSpec((block_q, block_k), lambda i, j: (i, j)),  # adj
                h_spec,                                                # h
            ],
            out_specs=pl.BlockSpec((block_q, f_pad), lambda i, j: (i, 0)),
            scratch_shapes=[
                pltpu.VMEM((block_q, 1), jnp.float32),      # running max
                pltpu.VMEM((block_q, 1), jnp.float32),      # running sum
                pltpu.VMEM((block_q, f_pad), jnp.float32),  # accumulator
            ],
        ),
        compiler_params=pltpu.CompilerParams(
            dimension_semantics=("parallel", "arbitrary"),
            vmem_limit_bytes=vmem2),
    )(f1, f2t, adj_i8, h)

    return out[:N, :out_f]


# --------------------------------------------------------------------------
# Pure-JAX reference (matches the PyTorch forward)
# --------------------------------------------------------------------------
def reference_gat(x, W, a, adj, alpha=0.2):
    h = x @ W
    out_f = W.shape[1]
    f1 = h @ a[:out_f]          # (N, 1)
    f2 = h @ a[out_f:]          # (N, 1)
    e = f1 + f2.T
    e = jnp.where(e > 0, e, alpha * e)
    e = jnp.where(adj > 0, e, -9e15)
    attn = jax.nn.softmax(e, axis=1)
    h_prime = attn @ h
    return jnp.where(h_prime > 0, h_prime, jnp.expm1(h_prime))


if __name__ == "__main__":
    def run_case(key, N, in_f, out_f, alpha=0.2):
        k_x, k_w, k_a, k_adj = jax.random.split(key, 4)
        # Deterministic parameter init mirroring reset_parameters():
        #   W ~ U(-1/sqrt(out_features), 1/sqrt(out_features)); a ~ U(-1, 1)
        stdv_w = 1.0 / (out_f ** 0.5)
        W = jax.random.uniform(k_w, (in_f, out_f), jnp.float32, -stdv_w, stdv_w)
        a = jax.random.uniform(k_a, (2 * out_f, 1), jnp.float32, -1.0, 1.0)
        x = jax.random.normal(k_x, (N, in_f), jnp.float32)
        # Symmetric adjacency with self-loops (as the calling model does).
        adj_rand = (jax.random.uniform(k_adj, (N, N)) > 0.6).astype(jnp.float32)
        adj = jnp.clip(adj_rand + adj_rand.T + jnp.eye(N, dtype=jnp.float32),
                       0.0, 1.0)

        out = jax.block_until_ready(
            graph_attention_layer(x, W, a, adj, alpha=alpha))
        ref = reference_gat(x, W, a, adj, alpha=alpha)
        assert out.shape == (N, out_f)
        # bf16 h / bf16 p on the value path -> tolerance loosened vs pure f32.
        assert jnp.allclose(out, ref, atol=3e-2, rtol=3e-2), (
            "mismatch vs reference (N=%d)" % N)

    key = jax.random.PRNGKey(0)
    k1, k2 = jax.random.split(key)
    run_case(k1, N=8, in_f=16, out_f=32)      # tiny graph (module-typical)
    run_case(k2, N=600, in_f=48, out_f=40)    # multi-tile online softmax path

    print("KERNEL_OK")
</pallas_src>

<mosaic_0001>
module attributes {stable_mosaic.version = 11 : i64} {
  func.func @_project_kernel(%arg0: i32, %arg1: memref<128x16xf32, #tpu.memory_space<vmem>>, %arg2: memref<16x128xf32, #tpu.memory_space<vmem>>, %arg3: memref<2x128xf32, #tpu.memory_space<vmem>>, %arg4: memref<128x128xbf16, #tpu.memory_space<vmem>>, %arg5: memref<128x1xf32, #tpu.memory_space<vmem>>, %arg6: memref<128x1xf32, #tpu.memory_space<vmem>>) attributes {dimension_semantics = [#tpu.dimension_semantics<parallel>], iteration_bounds = array<i64: 1>, scalar_prefetch = 0 : i64, scratch_operands = 0 : i64, tpu.core_type = #tpu.core_type<tc>, window_params = [{transform_indices = @transform_0, window_bounds = array<i64: 128, 16>}, {pipeline_mode = #tpu.pipeline_mode<synchronous>, transform_indices = @transform_1, window_bounds = array<i64: 16, 128>}, {pipeline_mode = #tpu.pipeline_mode<synchronous>, transform_indices = @transform_2, window_bounds = array<i64: 2, 128>}, {transform_indices = @transform_3, window_bounds = array<i64: 128, 128>}, {transform_indices = @transform_4, window_bounds = array<i64: 128, 1>}, {transform_indices = @transform_5, window_bounds = array<i64: 128, 1>}]} {
    %c0 = arith.constant 0 : index
    %c0_0 = arith.constant 0 : index
    %0 = vector.load %arg1[%c0, %c0_0] : memref<128x16xf32, #tpu.memory_space<vmem>>, vector<128x16xf32>
    %c0_1 = arith.constant 0 : index
    %c0_2 = arith.constant 0 : index
    %1 = vector.load %arg2[%c0_1, %c0_2] : memref<16x128xf32, #tpu.memory_space<vmem>>, vector<16x128xf32>
    %cst = arith.constant dense<0.000000e+00> : vector<128x128xf32>
    %2 = tpu.matmul %0, %1, %cst {dimension_numbers = #tpu.dot_dimension_numbers<[1], [0], [0], [1], [0, 0, 1, 1], [], []>} : vector<128x16xf32>, vector<16x128xf32>, vector<128x128xf32> -> vector<128x128xf32>
    %3 = arith.truncf %2 : vector<128x128xf32> to vector<128x128xbf16>
    %c0_3 = arith.constant 0 : index
    %c0_4 = arith.constant 0 : index
    %4 = vector.load %arg4[%c0_3, %c0_4] : memref<128x128xbf16, #tpu.memory_space<vmem>>, vector<128x128xbf16>
    tpu.vector_store %arg4[%c0_3, %c0_4], %3 {strides = array<i32>} : memref<128x128xbf16, #tpu.memory_space<vmem>>, vector<128x128xbf16>,
    %c0_5 = arith.constant 0 : index
    %c0_6 = arith.constant 0 : index
    %5 = vector.load %arg3[%c0_5, %c0_6] : memref<2x128xf32, #tpu.memory_space<vmem>>, vector<1x128xf32>
    %c1 = arith.constant 1 : index
    %c0_7 = arith.constant 0 : index
    %6 = vector.load %arg3[%c1, %c0_7] : memref<2x128xf32, #tpu.memory_space<vmem>>, vector<1x128xf32>
    %7 = vector.broadcast %5 : vector<1x128xf32> to vector<128x128xf32>
    %8 = arith.mulf %2, %7 : vector<128x128xf32>
    %cst_8 = arith.constant dense<0.000000e+00> : vector<128xf32>
    %9 = vector.multi_reduction <add>, %8, %cst_8 [1] : vector<128x128xf32> to vector<128xf32>
    %10 = vector.shape_cast %9 : vector<128xf32> to vector<128x1xf32>
    %c0_9 = arith.constant 0 : index
    %c0_10 = arith.constant 0 : index
    %11 = vector.load %arg5[%c0_9, %c0_10] : memref<128x1xf32, #tpu.memory_space<vmem>>, vector<128x1xf32>
    tpu.vector_store %arg5[%c0_9, %c0_10], %10 {strides = array<i32>} : memref<128x1xf32, #tpu.memory_space<vmem>>, vector<128x1xf32>,
    %12 = vector.broadcast %6 : vector<1x128xf32> to vector<128x128xf32>
    %13 = arith.mulf %2, %12 : vector<128x128xf32>
    %cst_11 = arith.constant dense<0.000000e+00> : vector<128xf32>
    %14 = vector.multi_reduction <add>, %13, %cst_11 [1] : vector<128x128xf32> to vector<128xf32>
    %15 = vector.shape_cast %14 : vector<128xf32> to vector<128x1xf32>
    %c0_12 = arith.constant 0 : index
    %c0_13 = arith.constant 0 : index
    %16 = vector.load %arg6[%c0_12, %c0_13] : memref<128x1xf32, #tpu.memory_space<vmem>>, vector<128x1xf32>
    tpu.vector_store %arg6[%c0_12, %c0_13], %15 {strides = array<i32>} : memref<128x1xf32, #tpu.memory_space<vmem>>, vector<128x1xf32>,
    return
  }
  func.func @transform_0(%arg0: i32) -> (i32, i32) {
    %c0_i32 = arith.constant 0 : i32
    %c0_i32_0 = arith.constant 0 : i32
    return %arg0, %c0_i32 : i32, i32
  }
  func.func @transform_1(%arg0: i32) -> (i32, i32) {
    %c0_i32 = arith.constant 0 : i32
    %c0_i32_0 = arith.constant 0 : i32
    %c0_i32_1 = arith.constant 0 : i32
    return %c0_i32, %c0_i32_0 : i32, i32
  }
  func.func @transform_2(%arg0: i32) -> (i32, i32) {
    %c0_i32 = arith.constant 0 : i32
    %c0_i32_0 = arith.constant 0 : i32
    %c0_i32_1 = arith.constant 0 : i32
    return %c0_i32, %c0_i32_0 : i32, i32
  }
  func.func @transform_3(%arg0: i32) -> (i32, i32) {
    %c0_i32 = arith.constant 0 : i32
    %c0_i32_0 = arith.constant 0 : i32
    return %arg0, %c0_i32 : i32, i32
  }
  func.func @transform_4(%arg0: i32) -> (i32, i32) {
    %c0_i32 = arith.constant 0 : i32
    %c0_i32_0 = arith.constant 0 : i32
    return %arg0, %c0_i32 : i32, i32
  }
  func.func @transform_5(%arg0: i32) -> (i32, i32) {
    %c0_i32 = arith.constant 0 : i32
    %c0_i32_0 = arith.constant 0 : i32
    return %arg0, %c0_i32 : i32, i32
  }
}

</mosaic_0001>

<llo_original>
// kernel: tpu_custom_call.1
$region0: #{tpu_custom_call.1}
  #allocation0 [shape = 'u32[]', space=smem, size = 0x4, offset = 0x4, fixed_abs, tag = 'smem constant byte address 0x4 - core index']
  #allocation1 [shape = 'u32[72,128]{1,0:T(1,128)}', space=vmem, size = 0x9000, scoped, tag = 'internal scratch']
  %s0 = inlined_call_operand.vmem [shape: f32[128,16], index: 0, kind: input, shape index: {}]
  %s1 = inlined_call_operand.vmem [shape: f32[16,128], index: 1, kind: input, shape index: {}]
  %s2 = inlined_call_operand.vmem [shape: f32[2,128], index: 2, kind: input, shape index: {}]
  %s3 = inlined_call_operand.hbm [shape: bf16[128,128], index: 3, kind: output, shape index: {0}]
  %s4 = inlined_call_operand.vmem [shape: f32[128,1], index: 4, kind: output, shape index: {1}]
  %s5 = inlined_call_operand.vmem [shape: f32[128,1], index: 5, kind: output, shape index: {2}]
  %6 = xla_tuple %s3, %s4, %s5
  %s7 = sld [smem:[#allocation0]]
  $region38: #{tpu_custom_call.1} parent=0
    _
  %s9 = ssub.s32 1, %s7
  %s10 = scalar_select 0, %s9, %s7
  $region1: #{tpu_custom_call.1} parent=0
    #allocation2 [shape = 'u8[32768]{0}', space=vmem, size = 0x8000, scoped, tag = 'output window, operand 0, single buffered']
    #allocation3 [shape = 's32[1]{0}', space=sflag, size = 0x4, scoped, tag = 'scoped memory for tpu_custom_call.1']
    %11 = vsyncpa [#allocation3], 0
    // Predicated region
    $region2: #{tpu_custom_call.1} parent=1 // pred_check
      _
    $region3: #{tpu_custom_call.1} parent=1 // pred_check_branch
      %13 = sbr.rel (0) target = $region5
    $region4: #{tpu_custom_call.1} parent=1 // pred_region
      _
    $region5: #{tpu_custom_call.1} parent=1 // pred_fallthru
      _
    // Predicated region
    $region6: #{tpu_custom_call.1} parent=1 // pred_check
      _
    $region7: #{tpu_custom_call.1} parent=1 // pred_check_branch
      %15 = sbr.rel (0) target = $region9
    $region8: #{tpu_custom_call.1} parent=1 // pred_region
      _
    $region9: #{tpu_custom_call.1} parent=1 // pred_fallthru
      _
    // Predicated region
    $region10: #{tpu_custom_call.1} parent=1 // pred_check
      _
    $region11: #{tpu_custom_call.1} parent=1 // pred_check_branch
      %17 = sbr.rel (0) target = $region13
    $region12: #{tpu_custom_call.1} parent=1 // pred_region
      _
    $region13: #{tpu_custom_call.1} parent=1 // pred_fallthru
      _
    %v18 = vld [vmem:[%s0] sm:$0xff]
    %v19 = vld [vmem:[%s0 + $0x8] sm:$0xff]
    %v20 = vld [vmem:[%s0 + $0x10] sm:$0xff]
    %v21 = vld [vmem:[%s0 + $0x18] sm:$0xff]
    %v22 = vld [vmem:[%s0 + $0x20] sm:$0xff]
    %v23 = vld [vmem:[%s0 + $0x28] sm:$0xff]
    %v24 = vld [vmem:[%s0 + $0x30] sm:$0xff]
    %v25 = vld [vmem:[%s0 + $0x38] sm:$0xff]
    %v26 = vld [vmem:[%s0 + $0x40] sm:$0xff]
    %v27 = vld [vmem:[%s0 + $0x48] sm:$0xff]
    %v28 = vld [vmem:[%s0 + $0x50] sm:$0xff]
    %v29 = vld [vmem:[%s0 + $0x58] sm:$0xff]
    %v30 = vld [vmem:[%s0 + $0x60] sm:$0xff]
    %v31 = vld [vmem:[%s0 + $0x68] sm:$0xff]
    %v32 = vld [vmem:[%s0 + $0x70] sm:$0xff]
    %v33 = vld [vmem:[%s0 + $0x78] sm:$0xff]
    %v34 = vld [vmem:[%s1] sm:$0xff]
    %v35 = vld [vmem:[%s1 + $0x8] sm:$0xff]
    %vm36 = vcmask 130048
    %v38 = vsel %vm36, %v18, 0
    %v41 = vsel %vm36, %v19, 0
    %v44 = vsel %vm36, %v20, 0
    %v47 = vsel %vm36, %v21, 0
    %v50 = vsel %vm36, %v22, 0
    %v53 = vsel %vm36, %v23, 0
    %v56 = vsel %vm36, %v24, 0
    %v59 = vsel %vm36, %v25, 0
    %v62 = vsel %vm36, %v26, 0
    %v65 = vsel %vm36, %v27, 0
    %v68 = vsel %vm36, %v28, 0
    %v71 = vsel %vm36, %v29, 0
    %v74 = vsel %vm36, %v30, 0
    %v77 = vsel %vm36, %v31, 0
    %v80 = vsel %vm36, %v32, 0
    %v83 = vsel %vm36, %v33, 0
    %85 = vmatpush.msra.mxu0 0.0
    %86 = vmatpush.msra.mxu0 0.0
    %87 = vmatpush.msra.mxu0 0.0
    %88 = vmatpush.msra.mxu0 0.0
    %89 = vmatpush.msra.mxu0 0.0
    %90 = vmatpush.msra.mxu0 0.0
    %91 = vmatpush.msra.mxu0 0.0
    %92 = vmatpush.msra.mxu0 0.0
    %93 = vmatpush.msra.mxu0 0.0
    %94 = vmatpush.msra.mxu0 0.0
    %95 = vmatpush.msra.mxu0 0.0
    %96 = vmatpush.msra.mxu0 0.0
    %97 = vmatpush.msra.mxu0 0.0
    %98 = vmatpush.msra.mxu0 0.0
    %99 = vmatpush.msra.mxu0 %v35
    %100 = vmatpush.msra.mxu0 %v34
    %101 = vmatmul.f32.gmra.mxu0 %v38
    %v102 = vpop.f32.mrf.mxu0
    %v103 = vadd.f32 0.0, %v102
    %104 = vmatmul.f32.gmra.mxu0 %v41
    %v105 = vpop.f32.mrf.mxu0
    %v106 = vadd.f32 0.0, %v105
    %107 = vmatmul.f32.gmra.mxu0 %v44
    %v108 = vpop.f32.mrf.mxu0
    %v109 = vadd.f32 0.0, %v108
    %110 = vmatmul.f32.gmra.mxu0 %v47
    %v111 = vpop.f32.mrf.mxu0
    %v112 = vadd.f32 0.0, %v111
    %113 = vmatmul.f32.gmra.mxu0 %v50
    %v114 = vpop.f32.mrf.mxu0
    %v115 = vadd.f32 0.0, %v114
    %116 = vmatmul.f32.gmra.mxu0 %v53
    %v117 = vpop.f32.mrf.mxu0
    %v118 = vadd.f32 0.0, %v117
    %119 = vmatmul.f32.gmra.mxu0 %v56
    %v120 = vpop.f32.mrf.mxu0
    %v121 = vadd.f32 0.0, %v120
    %122 = vmatmul.f32.gmra.mxu0 %v59
    %v123 = vpop.f32.mrf.mxu0
    %v124 = vadd.f32 0.0, %v123
    %125 = vmatmul.f32.gmra.mxu0 %v62
    %v126 = vpop.f32.mrf.mxu0
    %v127 = vadd.f32 0.0, %v126
    %128 = vmatmul.f32.gmra.mxu0 %v65
    %v129 = vpop.f32.mrf.mxu0
    %v130 = vadd.f32 0.0, %v129
    %131 = vmatmul.f32.gmra.mxu0 %v68
    %v132 = vpop.f32.mrf.mxu0
    %v133 = vadd.f32 0.0, %v132
    %134 = vmatmul.f32.gmra.mxu0 %v71
    %v135 = vpop.f32.mrf.mxu0
    %v136 = vadd.f32 0.0, %v135
    %137 = vmatmul.f32.gmra.mxu0 %v74
    %v138 = vpop.f32.mrf.mxu0
    %v139 = vadd.f32 0.0, %v138
    %140 = vmatmul.f32.gmra.mxu0 %v77
    %v141 = vpop.f32.mrf.mxu0
    %v142 = vadd.f32 0.0, %v141
    %143 = vmatmul.f32.gmra.mxu0 %v80
    %v144 = vpop.f32.mrf.mxu0
    %v145 = vadd.f32 0.0, %v144
    %146 = vmatmul.f32.gmra.mxu0 %v83
    %v147 = vpop.f32.mrf.mxu0
    %v148 = vadd.f32 0.0, %v147
    %149 = vdwg.mxu0
    %v150 = vpack.c.bf16 %v103, %v103
    %v151 = vpack.c.bf16 %v106, %v106
    %v152 = vpack.c.bf16 %v109, %v109
    %v153 = vpack.c.bf16 %v112, %v112
    %v154 = vpack.c.bf16 %v115, %v115
    %v155 = vpack.c.bf16 %v118, %v118
    %v156 = vpack.c.bf16 %v121, %v121
    %v157 = vpack.c.bf16 %v124, %v124
    %v158 = vpack.c.bf16 %v127, %v127
    %v159 = vpack.c.bf16 %v130, %v130
    %v160 = vpack.c.bf16 %v133, %v133
    %v161 = vpack.c.bf16 %v136, %v136
    %v162 = vpack.c.bf16 %v139, %v139
    %v163 = vpack.c.bf16 %v142, %v142
    %v164 = vpack.c.bf16 %v145, %v145
    %v165 = vpack.c.bf16 %v148, %v148
    %166 = vst [vmem:[#allocation2] sm:$0xf] %v150
    %167 = vst [vmem:[#allocation2 + $0x4] sm:$0xf] %v151
    %168 = vst [vmem:[#allocation2 + $0x8] sm:$0xf] %v152
    %169 = vst [vmem:[#allocation2 + $0xc] sm:$0xf] %v153
    %170 = vst [vmem:[#allocation2 + $0x10] sm:$0xf] %v154
    %171 = vst [vmem:[#allocation2 + $0x14] sm:$0xf] %v155
    %172 = vst [vmem:[#allocation2 + $0x18] sm:$0xf] %v156
    %173 = vst [vmem:[#allocation2 + $0x1c] sm:$0xf] %v157
    %174 = vst [vmem:[#allocation2 + $0x20] sm:$0xf] %v158
    %175 = vst [vmem:[#allocation2 + $0x24] sm:$0xf] %v159
    %176 = vst [vmem:[#allocation2 + $0x28] sm:$0xf] %v160
    %177 = vst [vmem:[#allocation2 + $0x2c] sm:$0xf] %v161
    %178 = vst [vmem:[#allocation2 + $0x30] sm:$0xf] %v162
    %179 = vst [vmem:[#allocation2 + $0x34] sm:$0xf] %v163
    %180 = vst [vmem:[#allocation2 + $0x38] sm:$0xf] %v164
    %181 = vst [vmem:[#allocation2 + $0x3c] sm:$0xf] %v165
    %v182 = vld [vmem:[%s2] sm:$0x1]
    %v183 = vld [vmem:[%s2 + $0x1] sm:$0x1]
    %v184 = vperm.slane %v182, 0
    %v185 = vmul.f32 %v103, %v184
    %v186 = vmul.f32 %v106, %v184
    %v187 = vmul.f32 %v109, %v184
    %v188 = vmul.f32 %v112, %v184
    %v189 = vmul.f32 %v115, %v184
    %v190 = vmul.f32 %v118, %v184
    %v191 = vmul.f32 %v121, %v184
    %v192 = vmul.f32 %v124, %v184
    %v193 = vmul.f32 %v127, %v184
    %v194 = vmul.f32 %v130, %v184
    %v195 = vmul.f32 %v133, %v184
    %v196 = vmul.f32 %v136, %v184
    %v197 = vmul.f32 %v139, %v184
    %v198 = vmul.f32 %v142, %v184
    %v199 = vmul.f32 %v145, %v184
    %v200 = vmul.f32 %v148, %v184
    %201 = vadd.xlane.f32.xlu0 %v185
    %v202 = vpop.xlane.xlu0 %201
    %203 = vadd.xlane.f32.xlu0 %v186
    %v204 = vpop.xlane.xlu0 %203
    %205 = vadd.xlane.f32.xlu0 %v187
    %v206 = vpop.xlane.xlu0 %205
    %207 = vadd.xlane.f32.xlu0 %v188
    %v208 = vpop.xlane.xlu0 %207
    %209 = vadd.xlane.f32.xlu0 %v189
    %v210 = vpop.xlane.xlu0 %209
    %211 = vadd.xlane.f32.xlu0 %v190
    %v212 = vpop.xlane.xlu0 %211
    %213 = vadd.xlane.f32.xlu0 %v191
    %v214 = vpop.xlane.xlu0 %213
    %215 = vadd.xlane.f32.xlu0 %v192
    %v216 = vpop.xlane.xlu0 %215
    %217 = vadd.xlane.f32.xlu0 %v193
    %v218 = vpop.xlane.xlu0 %217
    %219 = vadd.xlane.f32.xlu0 %v194
    %v220 = vpop.xlane.xlu0 %219
    %221 = vadd.xlane.f32.xlu0 %v195
    %v222 = vpop.xlane.xlu0 %221
    %223 = vadd.xlane.f32.xlu0 %v196
    %v224 = vpop.xlane.xlu0 %223
    %225 = vadd.xlane.f32.xlu0 %v197
    %v226 = vpop.xlane.xlu0 %225
    %227 = vadd.xlane.f32.xlu0 %v198
    %v228 = vpop.xlane.xlu0 %227
    %229 = vadd.xlane.f32.xlu0 %v199
    %v230 = vpop.xlane.xlu0 %229
    %231 = vadd.xlane.f32.xlu0 %v200
    %v232 = vpop.xlane.xlu0 %231
    %vm233 = vcmask 7168
    %234 = vst.msk [vmem:[%s4] sm:$0xff] %vm233, %v202
    %235 = vst.msk [vmem:[%s4 + $0x8] sm:$0xff] %vm233, %v204
    %236 = vst.msk [vmem:[%s4 + $0x10] sm:$0xff] %vm233, %v206
    %237 = vst.msk [vmem:[%s4 + $0x18] sm:$0xff] %vm233, %v208
    %238 = vst.msk [vmem:[%s4 + $0x20] sm:$0xff] %vm233, %v210
    %239 = vst.msk [vmem:[%s4 + $0x28] sm:$0xff] %vm233, %v212
    %240 = vst.msk [vmem:[%s4 + $0x30] sm:$0xff] %vm233, %v214
    %241 = vst.msk [vmem:[%s4 + $0x38] sm:$0xff] %vm233, %v216
    %242 = vst.msk [vmem:[%s4 + $0x40] sm:$0xff] %vm233, %v218
    %243 = vst.msk [vmem:[%s4 + $0x48] sm:$0xff] %vm233, %v220
    %244 = vst.msk [vmem:[%s4 + $0x50] sm:$0xff] %vm233, %v222
    %245 = vst.msk [vmem:[%s4 + $0x58] sm:$0xff] %vm233, %v224
    %246 = vst.msk [vmem:[%s4 + $0x60] sm:$0xff] %vm233, %v226
    %247 = vst.msk [vmem:[%s4 + $0x68] sm:$0xff] %vm233, %v228
    %248 = vst.msk [vmem:[%s4 + $0x70] sm:$0xff] %vm233, %v230
    %249 = vst.msk [vmem:[%s4 + $0x78] sm:$0xff] %vm233, %v232
    %v250 = vperm.slane %v183, 0
    %v251 = vmul.f32 %v103, %v250
    %v252 = vmul.f32 %v106, %v250
    %v253 = vmul.f32 %v109, %v250
    %v254 = vmul.f32 %v112, %v250
    %v255 = vmul.f32 %v115, %v250
    %v256 = vmul.f32 %v118, %v250
    %v257 = vmul.f32 %v121, %v250
    %v258 = vmul.f32 %v124, %v250
    %v259 = vmul.f32 %v127, %v250
    %v260 = vmul.f32 %v130, %v250
    %v261 = vmul.f32 %v133, %v250
    %v262 = vmul.f32 %v136, %v250
    %v263 = vmul.f32 %v139, %v250
    %v264 = vmul.f32 %v142, %v250
    %v265 = vmul.f32 %v145, %v250
    %v266 = vmul.f32 %v148, %v250
    %267 = vadd.xlane.f32.xlu0 %v251
    %v268 = vpop.xlane.xlu0 %267
    %269 = vadd.xlane.f32.xlu0 %v252
    %v270 = vpop.xlane.xlu0 %269
    %271 = vadd.xlane.f32.xlu0 %v253
    %v272 = vpop.xlane.xlu0 %271
    %273 = vadd.xlane.f32.xlu0 %v254
    %v274 = vpop.xlane.xlu0 %273
    %275 = vadd.xlane.f32.xlu0 %v255
    %v276 = vpop.xlane.xlu0 %275
    %277 = vadd.xlane.f32.xlu0 %v256
    %v278 = vpop.xlane.xlu0 %277
    %279 = vadd.xlane.f32.xlu0 %v257
    %v280 = vpop.xlane.xlu0 %279
    %281 = vadd.xlane.f32.xlu0 %v258
    %v282 = vpop.xlane.xlu0 %281
    %283 = vadd.xlane.f32.xlu0 %v259
    %v284 = vpop.xlane.xlu0 %283
    %285 = vadd.xlane.f32.xlu0 %v260
    %v286 = vpop.xlane.xlu0 %285
    %287 = vadd.xlane.f32.xlu0 %v261
    %v288 = vpop.xlane.xlu0 %287
    %289 = vadd.xlane.f32.xlu0 %v262
    %v290 = vpop.xlane.xlu0 %289
    %291 = vadd.xlane.f32.xlu0 %v263
    %v292 = vpop.xlane.xlu0 %291
    %293 = vadd.xlane.f32.xlu0 %v264
    %v294 = vpop.xlane.xlu0 %293
    %295 = vadd.xlane.f32.xlu0 %v265
    %v296 = vpop.xlane.xlu0 %295
    %297 = vadd.xlane.f32.xlu0 %v266
    %v298 = vpop.xlane.xlu0 %297
    %299 = vst.msk [vmem:[%s5] sm:$0xff] %vm233, %v268
    %300 = vst.msk [vmem:[%s5 + $0x8] sm:$0xff] %vm233, %v270
    %301 = vst.msk [vmem:[%s5 + $0x10] sm:$0xff] %vm233, %v272
    %302 = vst.msk [vmem:[%s5 + $0x18] sm:$0xff] %vm233, %v274
    %303 = vst.msk [vmem:[%s5 + $0x20] sm:$0xff] %vm233, %v276
    %304 = vst.msk [vmem:[%s5 + $0x28] sm:$0xff] %vm233, %v278
    %305 = vst.msk [vmem:[%s5 + $0x30] sm:$0xff] %vm233, %v280
    %306 = vst.msk [vmem:[%s5 + $0x38] sm:$0xff] %vm233, %v282
    %307 = vst.msk [vmem:[%s5 + $0x40] sm:$0xff] %vm233, %v284
    %308 = vst.msk [vmem:[%s5 + $0x48] sm:$0xff] %vm233, %v286
    %309 = vst.msk [vmem:[%s5 + $0x50] sm:$0xff] %vm233, %v288
    %310 = vst.msk [vmem:[%s5 + $0x58] sm:$0xff] %vm233, %v290
    %311 = vst.msk [vmem:[%s5 + $0x60] sm:$0xff] %vm233, %v292
    %312 = vst.msk [vmem:[%s5 + $0x68] sm:$0xff] %vm233, %v294
    %313 = vst.msk [vmem:[%s5 + $0x70] sm:$0xff] %vm233, %v296
    %314 = vst.msk [vmem:[%s5 + $0x78] sm:$0xff] %vm233, %v298
    // Predicated region
    $region14: #{tpu_custom_call.1} parent=1 // pred_check
      _
    $region15: #{tpu_custom_call.1} parent=1 // pred_check_branch
      %316 = sbr.rel (0) target = $region17
    $region16: #{tpu_custom_call.1} parent=1 // pred_region
      %318 = vsyncadd [#allocation3], 0
      %s319 = sshll.u32 [#allocation2], 4
      %s320 = int_to_ptr.vmem [resolvable:$true] %s319
      %s321 = sshll.u32 %s3, 4
      %s322 = int_to_ptr.hbm [resolvable:$true] %s321
      %327 = dma.vmem_to_hbm [thread:$0]  %s320, 1024, %s322, [#allocation3], 64, 64, 4
    $region17: #{tpu_custom_call.1} parent=1 // pred_fallthru
      _
    // Predicated region
    $region18: #{tpu_custom_call.1} parent=1 // pred_check
      _
    $region19: #{tpu_custom_call.1} parent=1 // pred_check_branch
      %329 = sbr.rel (0) target = $region21
    $region20: #{tpu_custom_call.1} parent=1 // pred_region
      _
    $region21: #{tpu_custom_call.1} parent=1 // pred_fallthru
      _
    // Predicated region
    $region22: #{tpu_custom_call.1} parent=1 // pred_check
      _
    $region23: #{tpu_custom_call.1} parent=1 // pred_check_branch
      %331 = sbr.rel (0) target = $region25
    $region24: #{tpu_custom_call.1} parent=1 // pred_region
      _
    $region25: #{tpu_custom_call.1} parent=1 // pred_fallthru
      _
    // Predicated region
    $region26: #{tpu_custom_call.1} parent=1 // pred_check
      _
    $region27: #{tpu_custom_call.1} parent=1 // pred_check_branch
      %333 = sbr.rel (0) target = $region29
    $region28: #{tpu_custom_call.1} parent=1 // pred_region
      %335 = dma.done [#allocation3], 1024
    $region29: #{tpu_custom_call.1} parent=1 // pred_fallthru
      _
    // Predicated region
    $region30: #{tpu_custom_call.1} parent=1 // pred_check
      _
    $region31: #{tpu_custom_call.1} parent=1 // pred_check_branch
      %337 = sbr.rel (0) target = $region33
    $region32: #{tpu_custom_call.1} parent=1 // pred_region
      _
    $region33: #{tpu_custom_call.1} parent=1 // pred_fallthru
      _
    // Predicated region
    $region34: #{tpu_custom_call.1} parent=1 // pred_check
      _
    $region35: #{tpu_custom_call.1} parent=1 // pred_check_branch
      %339 = sbr.rel (0) target = $region37
    $region36: #{tpu_custom_call.1} parent=1 // pred_region
      _
    $region37: #{tpu_custom_call.1} parent=1 // pred_fallthru
      _
    %340 = vsyncpa [#allocation3], 1

</llo_original>
